<compile_context>
chip_gen: v6e
topology: v6e:2x2x1
jax: 0.10.0
libtpu: 0.0.40
codegen_flags: <defaults>
</compile_context>

<pallas_src>
import functools

import numpy as np
import jax
import jax.numpy as jnp
from jax.experimental import pallas as pl
from jax.experimental.pallas import tpu as pltpu


# ----------------------------------------------------------------------------
# Kernel
# ----------------------------------------------------------------------------
def _basic_model_kernel(x_ref, adj_ref, slab_ref, out_ref):
    f32 = jnp.float32
    N, C = x_ref.shape

    x = x_ref[...]
    adj = adj_ref[...]

    # --- single packed slab (lane width 128) ---------------------------------------------
    # rows [0:C)      memT (patterns^T, zero-padded lanes)
    # rows [C:2C)     wfc  (zero-padded lanes)
    # row  2C         fc bias
    # row  2C+1       softmax pad mask (0 on real pattern lanes, -1e30 on padding)
    # rows [2C+2 ...] wn1 | ws1 | wn2' | ws2' | bn1 | c1 | c2   (each in lanes 0:C)
    memt = slab_ref[0:C, :]                       # (C, 128)
    wfc = slab_ref[C:2 * C, :]                    # (C, 128)
    fc_bias = slab_ref[2 * C:2 * C + 1, :]        # (1, 128)
    pad_mask = slab_ref[2 * C + 1:2 * C + 2, :]   # (1, 128)
    base = 2 * C + 2
    wn1 = slab_ref[base:base + C, 0:C]                        # (C, C)
    ws1 = slab_ref[base + C:base + 2 * C, 0:C]                # (C, C)
    wn2 = slab_ref[base + 2 * C:base + 3 * C, 0:C]            # (C, C)  conv folded in
    ws2 = slab_ref[base + 3 * C:base + 4 * C, 0:C]            # (C, C)  conv folded in
    bn1 = slab_ref[base + 4 * C:base + 4 * C + 1, 0:C]        # (1, C)
    c1 = slab_ref[base + 4 * C + 1:base + 4 * C + 2, 0:C]     # (1, C)
    c2 = slab_ref[base + 4 * C + 2:base + 4 * C + 3, 0:C]     # (1, C)

    dot = lambda a, b: jnp.dot(a, b, preferred_element_type=f32)

    # ---- gcn1: Linear(adj @ x) + Linear_noBias(x); ReLU (no lane-axis concat) -----------
    ax = dot(adj, x)
    h = jnp.maximum(dot(ax, wn1) + dot(x, ws1) + bn1, 0.0)

    # ---- tcn1 (Conv1d 1->1 along the feature axis) was folded offline into gcn2.  Its ----
    # ---- bias contribution rowsum(adj)*c1 is absorbed by reassociation:                  -
    # ----   (adj @ h) @ wn2' + rowsum(adj) * c1  ==  adj @ (h @ wn2' + c1)                -
    # ---- so no XLU cross-lane reduction is needed. ---------------------------------------
    t = dot(h, wn2) + c1
    g = dot(adj, t) + dot(h, ws2) + c2

    # ---- memory: attention = softmax(g @ M^T) over real pattern lanes (masked, 128-wide) -
    logits = dot(g, memt) + pad_mask
    m = jnp.max(logits, axis=-1, keepdims=True)
    e = jnp.exp(logits - m)
    attn = e * pl.reciprocal(jnp.sum(e, axis=-1, keepdims=True), approx=True)
    # (memory's z output is discarded by the module: z is overwritten below)

    # ---- residual:  x.reshape(-1, C) + x  (with B=1 this is exactly 2*g) -----------------
    z = g + g

    # ---- exact (erf) GELU + Linear(out_channel -> y_len), lane-dense single output ------
    gz = 0.5 * z * (1.0 + jax.lax.erf(z * f32(0.7071067811865476)))
    out_ref[0:N, :] = dot(gz, wfc) + fc_bias      # rows 0:N  -> fc output (lanes 0:y_len)
    out_ref[N:2 * N, :] = attn                    # rows N:2N -> attention (lanes 0:P)
    # TODO(synk): F.dropout is identity at inference (training=False); omitted.


# ----------------------------------------------------------------------------
# Glue: parameter construction, offline folding/packing, pallas_call wrapper
# ----------------------------------------------------------------------------
def conv1d_as_matrix(w, L, dilation, padding):
    """Band matrix T so that  y = x @ T  ==  Conv1d(1->1)(x[:, None, :])."""
    K = w.shape[0]
    L_out = L + 2 * padding - dilation * (K - 1)
    T = np.zeros((L, L_out), np.float32)
    for j in range(L_out):
        for k in range(K):
            i = j - padding + k * dilation
            if 0 <= i < L:
                T[i, j] = float(w[k])
    return jnp.asarray(T)


def init_params(key, C, P, y_len, K=3, dilation=1):
    ks = jax.random.split(key, 10)
    s = 0.2
    w_conv = np.asarray(jax.random.normal(ks[5], (K,), jnp.float32)) * s
    padding = int((K - 1) * dilation / 2)
    params = {
        # gcn1 (weights stored directly as [in, out])
        "wn1": jax.random.normal(ks[0], (C, C), jnp.float32) * s,
        "bn1": jax.random.normal(ks[1], (1, C), jnp.float32) * s,
        "ws1": jax.random.normal(ks[2], (C, C), jnp.float32) * s,
        # tcn1 (Conv1d 1->1) as band matrix + broadcast bias row
        "tcn_T": conv1d_as_matrix(w_conv, C, dilation, padding),
        "tcn_b": jnp.full((1, C), float(jax.random.normal(ks[6], ())) * s,
                          jnp.float32),
        # gcn2
        "wn2": jax.random.normal(ks[3], (C, C), jnp.float32) * s,
        "bn2": jax.random.normal(ks[4], (1, C), jnp.float32) * s,
        "ws2": jax.random.normal(ks[7], (C, C), jnp.float32) * s,
        # memory patterns, stored transposed [C, P]
        "memT": jax.random.normal(ks[8], (C, P), jnp.float32) * s,
        # fc, stored [C, y_len]
        "wfc": jax.random.normal(ks[9], (C, y_len), jnp.float32) * s,
        "bfc": jnp.zeros((1, y_len), jnp.float32),
    }
    return params


def pack_params(params, P, y_len, pad=128):
    """Fold the Conv1d into gcn2 (float64, exact) and pack everything into ONE 128-lane slab."""
    f64 = lambda a: np.asarray(a, np.float64)
    wn1, ws1, bn1 = f64(params["wn1"]), f64(params["ws1"]), f64(params["bn1"])
    wn2, ws2, bn2 = f64(params["wn2"]), f64(params["ws2"]), f64(params["bn2"])
    T, bc = f64(params["tcn_T"]), f64(params["tcn_b"])
    memT, wfc, bfc = f64(params["memT"]), f64(params["wfc"]), f64(params["bfc"])
    C = wn1.shape[0]

    wn2p = T @ wn2                      # conv folded into gcn2 network weight
    ws2p = T @ ws2                      # conv folded into gcn2 self weight
    c1 = bc @ wn2                       # conv-bias term that rides on adj (via reassociation)
    c2 = bc @ ws2 + bn2                 # conv-bias self term + gcn2 bias

    slab = np.zeros((6 * C + 5, pad), np.float32)
    slab[0:C, :P] = memT
    slab[C:2 * C, :y_len] = wfc
    slab[2 * C, :y_len] = bfc[0]
    slab[2 * C + 1, :] = -1e30          # softmax mask for padded pattern lanes
    slab[2 * C + 1, :P] = 0.0
    base = 2 * C + 2
    slab[base:base + C, :C] = wn1
    slab[base + C:base + 2 * C, :C] = ws1
    slab[base + 2 * C:base + 3 * C, :C] = wn2p
    slab[base + 3 * C:base + 4 * C, :C] = ws2p
    slab[base + 4 * C, :C] = bn1[0]
    slab[base + 4 * C + 1, :C] = c1[0]
    slab[base + 4 * C + 2, :C] = c2[0]
    return jnp.asarray(slab)


def basic_model_forward(x, adj, slab, *, n_pattern, y_len):
    """x: [N, C] node features (B=1), adj: [N, N]. Returns (out [1,N,y], attn [1,N,P])."""
    N, _ = x.shape
    pad = slab.shape[-1]
    vmem = pl.BlockSpec(memory_space=pltpu.MemorySpace.VMEM)

    buf = pl.pallas_call(
        _basic_model_kernel,
        out_shape=jax.ShapeDtypeStruct((2 * N, pad), jnp.float32),
        in_specs=[vmem, vmem, vmem],
        out_specs=vmem,
    )(x, adj, slab)

    out = buf[:N, :y_len][None, ...]
    attn = buf[N:, :n_pattern][None, ...]
    return out, attn


# pure-JAX reference (module-faithful, un-folded math) at HIGHEST matmul precision
def reference_forward(x, adj, p):
    hp = jax.lax.Precision.HIGHEST
    dot = lambda a, b: jnp.dot(a, b, precision=hp)
    ax = dot(adj, x)
    h = dot(ax, p["wn1"]) + p["bn1"] + dot(x, p["ws1"])
    h = jnp.maximum(h, 0.0)
    h = dot(h, p["tcn_T"]) + p["tcn_b"]
    ah = dot(adj, h)
    g = dot(ah, p["wn2"]) + p["bn2"] + dot(h, p["ws2"])
    attn = jax.nn.softmax(dot(g, p["memT"]), axis=-1)
    z = g + g
    gz = 0.5 * z * (1.0 + jax.lax.erf(z * 0.7071067811865476))
    out = dot(gz, p["wfc"]) + p["bfc"]
    return out[None, ...], attn[None, ...]


if __name__ == "__main__":
    # B=1, N=16 nodes, in_channel = hidden_channel = out_channel = 16, y_len = 8,
    # 8 memory patterns, Conv1d(1->1, kernel=3, dilation=1, padding=1).
    N, C, P, Y = 16, 16, 8, 8
    key = jax.random.PRNGKey(0)
    kx, kadj, kp = jax.random.split(key, 3)

    x = jax.random.normal(kx, (N, C), jnp.float32)            # data.x (B=1)
    adj = jax.random.uniform(kadj, (N, N), jnp.float32) / N   # dense adjacency
    params = init_params(kp, C, P, Y)
    slab = pack_params(params, P, Y)

    fwd = jax.jit(functools.partial(basic_model_forward, n_pattern=P, y_len=Y))
    out, attn = fwd(x, adj, slab)
    out, attn = jax.block_until_ready((out, attn))

    ref_out, ref_attn = reference_forward(x, adj, params)
    assert out.shape == (1, N, Y) and attn.shape == (1, N, P)
    # out: headroom for the folded-weight / reassociated-bias math on the reduced-precision
    #      MXU vs. the HIGHEST-precision unfolded reference;
    # attn: additionally covers pl.reciprocal(approx=True) in the softmax normalization.
    np.testing.assert_allclose(np.asarray(out), np.asarray(ref_out),
                               rtol=2e-3, atol=2e-3)
    np.testing.assert_allclose(np.asarray(attn), np.asarray(ref_attn),
                               rtol=5e-3, atol=5e-3)
    print("KERNEL_OK")
</pallas_src>

<mosaic_0001>
module attributes {stable_mosaic.version = 11 : i64} {
  func.func @_basic_model_kernel(%arg0: memref<16x16xf32, #tpu.memory_space<vmem>>, %arg1: memref<16x16xf32, #tpu.memory_space<vmem>>, %arg2: memref<101x128xf32, #tpu.memory_space<vmem>>, %arg3: memref<32x128xf32, #tpu.memory_space<vmem>>) attributes {dimension_semantics = [], scalar_prefetch = 0 : i64, scratch_operands = 0 : i64, tpu.core_type = #tpu.core_type<tc>} {
    %c0 = arith.constant 0 : index
    %c0_0 = arith.constant 0 : index
    %0 = vector.load %arg0[%c0, %c0_0] : memref<16x16xf32, #tpu.memory_space<vmem>>, vector<16x16xf32>
    %c0_1 = arith.constant 0 : index
    %c0_2 = arith.constant 0 : index
    %1 = vector.load %arg1[%c0_1, %c0_2] : memref<16x16xf32, #tpu.memory_space<vmem>>, vector<16x16xf32>
    %c0_3 = arith.constant 0 : index
    %c0_4 = arith.constant 0 : index
    %2 = vector.load %arg2[%c0_3, %c0_4] : memref<101x128xf32, #tpu.memory_space<vmem>>, vector<16x128xf32>
    %c16 = arith.constant 16 : index
    %c0_5 = arith.constant 0 : index
    %3 = vector.load %arg2[%c16, %c0_5] : memref<101x128xf32, #tpu.memory_space<vmem>>, vector<16x128xf32>
    %c32 = arith.constant 32 : index
    %c0_6 = arith.constant 0 : index
    %4 = vector.load %arg2[%c32, %c0_6] : memref<101x128xf32, #tpu.memory_space<vmem>>, vector<1x128xf32>
    %c33 = arith.constant 33 : index
    %c0_7 = arith.constant 0 : index
    %5 = vector.load %arg2[%c33, %c0_7] : memref<101x128xf32, #tpu.memory_space<vmem>>, vector<1x128xf32>
    %c34 = arith.constant 34 : index
    %c0_8 = arith.constant 0 : index
    %6 = vector.load %arg2[%c34, %c0_8] : memref<101x128xf32, #tpu.memory_space<vmem>>, vector<16x16xf32>
    %c50 = arith.constant 50 : index
    %c0_9 = arith.constant 0 : index
    %7 = vector.load %arg2[%c50, %c0_9] : memref<101x128xf32, #tpu.memory_space<vmem>>, vector<16x16xf32>
    %c66 = arith.constant 66 : index
    %c0_10 = arith.constant 0 : index
    %8 = vector.load %arg2[%c66, %c0_10] : memref<101x128xf32, #tpu.memory_space<vmem>>, vector<16x16xf32>
    %c82 = arith.constant 82 : index
    %c0_11 = arith.constant 0 : index
    %9 = vector.load %arg2[%c82, %c0_11] : memref<101x128xf32, #tpu.memory_space<vmem>>, vector<16x16xf32>
    %c98 = arith.constant 98 : index
    %c0_12 = arith.constant 0 : index
    %10 = vector.load %arg2[%c98, %c0_12] : memref<101x128xf32, #tpu.memory_space<vmem>>, vector<1x16xf32>
    %c99 = arith.constant 99 : index
    %c0_13 = arith.constant 0 : index
    %11 = vector.load %arg2[%c99, %c0_13] : memref<101x128xf32, #tpu.memory_space<vmem>>, vector<1x16xf32>
    %c100 = arith.constant 100 : index
    %c0_14 = arith.constant 0 : index
    %12 = vector.load %arg2[%c100, %c0_14] : memref<101x128xf32, #tpu.memory_space<vmem>>, vector<1x16xf32>
    %cst = arith.constant dense<0.000000e+00> : vector<16x16xf32>
    %13 = tpu.matmul %1, %0, %cst {dimension_numbers = #tpu.dot_dimension_numbers<[1], [0], [0], [1], [0, 0, 1, 1], [], []>} : vector<16x16xf32>, vector<16x16xf32>, vector<16x16xf32> -> vector<16x16xf32>
    %cst_15 = arith.constant dense<0.000000e+00> : vector<16x16xf32>
    %14 = tpu.matmul %13, %6, %cst_15 {dimension_numbers = #tpu.dot_dimension_numbers<[1], [0], [0], [1], [0, 0, 1, 1], [], []>} : vector<16x16xf32>, vector<16x16xf32>, vector<16x16xf32> -> vector<16x16xf32>
    %cst_16 = arith.constant dense<0.000000e+00> : vector<16x16xf32>
    %15 = tpu.matmul %0, %7, %cst_16 {dimension_numbers = #tpu.dot_dimension_numbers<[1], [0], [0], [1], [0, 0, 1, 1], [], []>} : vector<16x16xf32>, vector<16x16xf32>, vector<16x16xf32> -> vector<16x16xf32>
    %16 = arith.addf %14, %15 : vector<16x16xf32>
    %17 = vector.broadcast %10 : vector<1x16xf32> to vector<16x16xf32>
    %18 = arith.addf %16, %17 : vector<16x16xf32>
    %cst_17 = arith.constant 0.000000e+00 : f32
    %19 = vector.broadcast %cst_17 : f32 to vector<16x16xf32>
    %20 = arith.maximumf %18, %19 : vector<16x16xf32>
    %cst_18 = arith.constant dense<0.000000e+00> : vector<16x16xf32>
    %21 = tpu.matmul %20, %8, %cst_18 {dimension_numbers = #tpu.dot_dimension_numbers<[1], [0], [0], [1], [0, 0, 1, 1], [], []>} : vector<16x16xf32>, vector<16x16xf32>, vector<16x16xf32> -> vector<16x16xf32>
    %22 = vector.broadcast %11 : vector<1x16xf32> to vector<16x16xf32>
    %23 = arith.addf %21, %22 : vector<16x16xf32>
    %cst_19 = arith.constant dense<0.000000e+00> : vector<16x16xf32>
    %24 = tpu.matmul %1, %23, %cst_19 {dimension_numbers = #tpu.dot_dimension_numbers<[1], [0], [0], [1], [0, 0, 1, 1], [], []>} : vector<16x16xf32>, vector<16x16xf32>, vector<16x16xf32> -> vector<16x16xf32>
    %cst_20 = arith.constant dense<0.000000e+00> : vector<16x16xf32>
    %25 = tpu.matmul %20, %9, %cst_20 {dimension_numbers = #tpu.dot_dimension_numbers<[1], [0], [0], [1], [0, 0, 1, 1], [], []>} : vector<16x16xf32>, vector<16x16xf32>, vector<16x16xf32> -> vector<16x16xf32>
    %26 = arith.addf %24, %25 : vector<16x16xf32>
    %27 = vector.broadcast %12 : vector<1x16xf32> to vector<16x16xf32>
    %28 = arith.addf %26, %27 : vector<16x16xf32>
    %cst_21 = arith.constant dense<0.000000e+00> : vector<16x128xf32>
    %29 = tpu.matmul %28, %2, %cst_21 {dimension_numbers = #tpu.dot_dimension_numbers<[1], [0], [0], [1], [0, 0, 1, 1], [], []>} : vector<16x16xf32>, vector<16x128xf32>, vector<16x128xf32> -> vector<16x128xf32>
    %30 = vector.broadcast %5 : vector<1x128xf32> to vector<16x128xf32>
    %31 = arith.addf %29, %30 : vector<16x128xf32>
    %cst_22 = arith.constant dense<0xFF800000> : vector<16xf32>
    %32 = vector.multi_reduction <maximumf>, %31, %cst_22 [1] : vector<16x128xf32> to vector<16xf32>
    %33 = vector.shape_cast %32 : vector<16xf32> to vector<16x1xf32>
    %34 = vector.broadcast %33 : vector<16x1xf32> to vector<16x128xf32>
    %35 = arith.subf %31, %34 : vector<16x128xf32>
    %36 = math.exp %35 : vector<16x128xf32>
    %cst_23 = arith.constant dense<0.000000e+00> : vector<16xf32>
    %37 = vector.multi_reduction <add>, %36, %cst_23 [1] : vector<16x128xf32> to vector<16xf32>
    %38 = vector.shape_cast %37 : vector<16xf32> to vector<16x1xf32>
    %39 = tpu.reciprocal %38 {approx = true} : vector<16x1xf32> -> vector<16x1xf32>
    %40 = vector.broadcast %39 : vector<16x1xf32> to vector<16x128xf32>
    %41 = arith.mulf %36, %40 : vector<16x128xf32>
    %42 = arith.addf %28, %28 : vector<16x16xf32>
    %cst_24 = arith.constant 5.000000e-01 : f32
    %43 = vector.broadcast %cst_24 : f32 to vector<16x16xf32>
    %44 = arith.mulf %43, %42 : vector<16x16xf32>
    %cst_25 = arith.constant 0.707106769 : f32
    %45 = vector.broadcast %cst_25 : f32 to vector<16x16xf32>
    %46 = arith.mulf %42, %45 : vector<16x16xf32>
    %47 = math.erf %46 : vector<16x16xf32>
    %cst_26 = arith.constant 1.000000e+00 : f32
    %48 = vector.broadcast %cst_26 : f32 to vector<16x16xf32>
    %49 = arith.addf %48, %47 : vector<16x16xf32>
    %50 = arith.mulf %44, %49 : vector<16x16xf32>
    %cst_27 = arith.constant dense<0.000000e+00> : vector<16x128xf32>
    %51 = tpu.matmul %50, %3, %cst_27 {dimension_numbers = #tpu.dot_dimension_numbers<[1], [0], [0], [1], [0, 0, 1, 1], [], []>} : vector<16x16xf32>, vector<16x128xf32>, vector<16x128xf32> -> vector<16x128xf32>
    %52 = vector.broadcast %4 : vector<1x128xf32> to vector<16x128xf32>
    %53 = arith.addf %51, %52 : vector<16x128xf32>
    %c0_28 = arith.constant 0 : index
    %c0_29 = arith.constant 0 : index
    %54 = vector.load %arg3[%c0_28, %c0_29] : memref<32x128xf32, #tpu.memory_space<vmem>>, vector<16x128xf32>
    tpu.vector_store %arg3[%c0_28, %c0_29], %53 {strides = array<i32>} : memref<32x128xf32, #tpu.memory_space<vmem>>, vector<16x128xf32>,
    %c16_30 = arith.constant 16 : index
    %c0_31 = arith.constant 0 : index
    %55 = vector.load %arg3[%c16_30, %c0_31] : memref<32x128xf32, #tpu.memory_space<vmem>>, vector<16x128xf32>
    tpu.vector_store %arg3[%c16_30, %c0_31], %41 {strides = array<i32>} : memref<32x128xf32, #tpu.memory_space<vmem>>, vector<16x128xf32>,
    return
  }
}

</mosaic_0001>

<llo_original>
// kernel: basic_model_forward.1
$region0: #{basic_model_forward.1}
  #allocation0 [shape = 'u32[]', space=smem, size = 0x4, offset = 0x4, fixed_abs, tag = 'smem constant byte address 0x4 - core index']
  #allocation1 [shape = 'u32[144,128]{1,0:T(1,128)}', space=vmem, size = 0x12000, scoped, tag = 'internal scratch']
  %s0 = inlined_call_operand.hbm [shape: f32[16,16], index: 0, kind: input, shape index: {}]
  %s1 = inlined_call_operand.hbm [shape: f32[16,16], index: 1, kind: input, shape index: {}]
  %s2 = inlined_call_operand.hbm [shape: f32[101,128], index: 2, kind: input, shape index: {}]
  %s3 = inlined_call_operand.vmem [shape: f32[32,128], index: 3, kind: output, shape index: {}]
  %s4 = sld [smem:[#allocation0]]
  $region34: #{basic_model_forward.1} parent=0
    _
  %s6 = ssub.s32 1, %s4
  %s7 = scalar_select 0, %s6, %s4
  $region1: #{basic_model_forward.1} parent=0
    #allocation2 [shape = 'u8[8192]{0}', space=vmem, size = 0x2000, scoped, tag = 'input window, operand 0, single buffered']
    #allocation3 [shape = 's32[1]{0}', space=sflag, size = 0x4, scoped, tag = 'scoped memory for basic_model_forward.1']
    #allocation4 [shape = 'u8[8192]{0}', space=vmem, size = 0x2000, scoped, tag = 'input window, operand 1, single buffered']
    #allocation5 [shape = 's32[1]{0}', space=sflag, size = 0x4, scoped, tag = 'scoped memory for basic_model_forward.1']
    #allocation6 [shape = 'u8[53248]{0}', space=vmem, size = 0xd000, scoped, tag = 'input window, operand 2, single buffered']
    %8 = vsyncpa [#allocation3], 0
    %9 = vsyncpa [#allocation5], 0
    // Predicated region
    $region2: #{basic_model_forward.1} parent=1 // pred_check
      _
    $region3: #{basic_model_forward.1} parent=1 // pred_check_branch
      %11 = sbr.rel (0) target = $region5
    $region4: #{basic_model_forward.1} parent=1 // pred_region
      %s13 = ssub.s32 256, 256
      %14 = vsyncadd [#allocation3], %s13
      %s15 = sshll.u32 [#allocation2], 4
      %s16 = int_to_ptr.vmem [resolvable:$true] %s15
      %21 = dma.hbm_to_vmem [thread:$0]  %s0, 256, %s16, [#allocation3], 128, 128, 8
    $region5: #{basic_model_forward.1} parent=1 // pred_fallthru
      _
    // Predicated region
    $region6: #{basic_model_forward.1} parent=1 // pred_check
      _
    $region7: #{basic_model_forward.1} parent=1 // pred_check_branch
      %23 = sbr.rel (0) target = $region9
    $region8: #{basic_model_forward.1} parent=1 // pred_region
      %s25 = ssub.s32 256, 256
      %26 = vsyncadd [#allocation5], %s25
      %s27 = sshll.u32 [#allocation4], 4
      %s28 = int_to_ptr.vmem [resolvable:$true] %s27
      %33 = dma.hbm_to_vmem [thread:$0]  %s1, 256, %s28, [#allocation5], 128, 128, 8
    $region9: #{basic_model_forward.1} parent=1 // pred_fallthru
      _
    // Predicated region
    $region10: #{basic_model_forward.1} parent=1 // pred_check
      _
    $region11: #{basic_model_forward.1} parent=1 // pred_check_branch
      %35 = sbr.rel (0) target = $region13
    $region12: #{basic_model_forward.1} parent=1 // pred_region
      %s37 = ssub.s32 1664, 1664
      %38 = vsyncadd [#allocation5], %s37
      %s39 = sshll.u32 [#allocation6], 4
      %s40 = int_to_ptr.vmem [resolvable:$true] %s39
      %45 = dma.hbm_to_vmem [thread:$0]  %s2, 1664, %s40, [#allocation5], 128, 128, 8
    $region13: #{basic_model_forward.1} parent=1 // pred_fallthru
      _
    // Predicated region
    $region14: #{basic_model_forward.1} parent=1 // pred_check
      _
    $region15: #{basic_model_forward.1} parent=1 // pred_check_branch
      %47 = sbr.rel (0) target = $region17
    $region16: #{basic_model_forward.1} parent=1 // pred_region
      %48 = dma.done [#allocation3], 256
    $region17: #{basic_model_forward.1} parent=1 // pred_fallthru
      _
    // Predicated region
    $region18: #{basic_model_forward.1} parent=1 // pred_check
      _
    $region19: #{basic_model_forward.1} parent=1 // pred_check_branch
      %50 = sbr.rel (0) target = $region21
    $region20: #{basic_model_forward.1} parent=1 // pred_region
      %51 = dma.done [#allocation5], 256
    $region21: #{basic_model_forward.1} parent=1 // pred_fallthru
      _
    // Predicated region
    $region22: #{basic_model_forward.1} parent=1 // pred_check
      _
    $region23: #{basic_model_forward.1} parent=1 // pred_check_branch
      %53 = sbr.rel (0) target = $region25
    $region24: #{basic_model_forward.1} parent=1 // pred_region
      %54 = dma.done [#allocation5], 1664
    $region25: #{basic_model_forward.1} parent=1 // pred_fallthru
      _
    %v55 = vld [vmem:[#allocation2] sm:$0xff]
    %v56 = vld [vmem:[#allocation2 + $0x8] sm:$0xff]
    %v57 = vld [vmem:[#allocation4] sm:$0xff]
    %v58 = vld [vmem:[#allocation4 + $0x8] sm:$0xff]
    %v59 = vld [vmem:[#allocation6] sm:$0xff]
    %v60 = vld [vmem:[#allocation6 + $0x8] sm:$0xff]
    %v61 = vld [vmem:[#allocation6 + $0x10] sm:$0xff]
    %v62 = vld [vmem:[#allocation6 + $0x18] sm:$0xff]
    %v63 = vld [vmem:[#allocation6 + $0x20] sm:$0x1]
    %v64 = vld [vmem:[#allocation6 + $0x21] sm:$0x1]
    %v65 = vld [vmem:[#allocation6 + $0x22] sm:$0xff]
    %v66 = vld [vmem:[#allocation6 + $0x2a] sm:$0xff]
    %v67 = vld [vmem:[#allocation6 + $0x32] sm:$0xff]
    %v68 = vld [vmem:[#allocation6 + $0x3a] sm:$0xff]
    %v69 = vld [vmem:[#allocation6 + $0x42] sm:$0xff]
    %v70 = vld [vmem:[#allocation6 + $0x4a] sm:$0xff]
    %v71 = vld [vmem:[#allocation6 + $0x52] sm:$0xff]
    %v72 = vld [vmem:[#allocation6 + $0x5a] sm:$0xff]
    %v73 = vld [vmem:[#allocation6 + $0x62] sm:$0x1]
    %v74 = vld [vmem:[#allocation6 + $0x63] sm:$0x1]
    %v75 = vld [vmem:[#allocation6 + $0x64] sm:$0x1]
    %vm76 = vcmask 130048
    %v78 = vsel %vm76, %v57, 0
    %v81 = vsel %vm76, %v58, 0
    %83 = vmatprep.subr.mxu0 0.0
    %84 = vmatpush1.msra.mxu0 0.0
    %85 = vmatprep.subr.mxu0 0.0
    %86 = vmatpush1.msra.mxu0 0.0
    %87 = vmatprep.subr.mxu0 0.0
    %88 = vmatpush1.msra.mxu0 0.0
    %89 = vmatprep.subr.mxu0 0.0
    %90 = vmatpush1.msra.mxu0 0.0
    %91 = vmatprep.subr.mxu0 0.0
    %92 = vmatpush1.msra.mxu0 0.0
    %93 = vmatprep.subr.mxu0 0.0
    %94 = vmatpush1.msra.mxu0 0.0
    %95 = vmatprep.subr.mxu0 0.0
    %96 = vmatpush1.msra.mxu0 0.0
    %97 = vmatprep.subr.mxu0 0.0
    %98 = vmatpush1.msra.mxu0 0.0
    %99 = vmatprep.subr.mxu0 0.0
    %100 = vmatpush1.msra.mxu0 0.0
    %101 = vmatprep.subr.mxu0 0.0
    %102 = vmatpush1.msra.mxu0 0.0
    %103 = vmatprep.subr.mxu0 0.0
    %104 = vmatpush1.msra.mxu0 0.0
    %105 = vmatprep.subr.mxu0 0.0
    %106 = vmatpush1.msra.mxu0 0.0
    %107 = vmatprep.subr.mxu0 0.0
    %108 = vmatpush1.msra.mxu0 0.0
    %109 = vmatprep.subr.mxu0 0.0
    %110 = vmatpush1.msra.mxu0 0.0
    %111 = vmatprep.subr.mxu0 0.0
    %112 = vmatpush1.msra.mxu0 %v56
    %113 = vmatprep.subr.mxu0 0.0
    %114 = vmatpush1.msra.mxu0 %v55
    %115 = vmatprep.subr.mxu0 0.0
    %116 = vmatpush2.msra.mxu0 0.0
    %117 = vmatprep.subr.mxu0 0.0
    %118 = vmatpush2.msra.mxu0 0.0
    %119 = vmatprep.subr.mxu0 0.0
    %120 = vmatpush2.msra.mxu0 0.0
    %121 = vmatprep.subr.mxu0 0.0
    %122 = vmatpush2.msra.mxu0 0.0
    %123 = vmatprep.subr.mxu0 0.0
    %124 = vmatpush2.msra.mxu0 0.0
    %125 = vmatprep.subr.mxu0 0.0
    %126 = vmatpush2.msra.mxu0 0.0
    %127 = vmatprep.subr.mxu0 0.0
    %128 = vmatpush2.msra.mxu0 0.0
    %129 = vmatprep.subr.mxu0 0.0
    %130 = vmatpush2.msra.mxu0 0.0
    %131 = vmatprep.subr.mxu0 0.0
    %132 = vmatpush2.msra.mxu0 0.0
    %133 = vmatprep.subr.mxu0 0.0
    %134 = vmatpush2.msra.mxu0 0.0
    %135 = vmatprep.subr.mxu0 0.0
    %136 = vmatpush2.msra.mxu0 0.0
    %137 = vmatprep.subr.mxu0 0.0
    %138 = vmatpush2.msra.mxu0 0.0
    %139 = vmatprep.subr.mxu0 0.0
    %140 = vmatpush2.msra.mxu0 0.0
    %141 = vmatprep.subr.mxu0 0.0
    %142 = vmatpush2.msra.mxu0 0.0
    %143 = vmatprep.subr.mxu0 0.0
    %144 = vmatpush2.msra.mxu0 0.0
    %145 = vmatprep.subr.mxu0 0.0
    %146 = vmatpush2.msra.mxu0 0.0
    %147 = vmatprep.mubr.f32.mxu0 0.0
    %148 = vmatmul.mubr.f32.gmra.mxu0 %v78
    %v149 = vpop.f32.mrf.mxu0
    %v150 = vadd.f32 0.0, %v149
    %v151 = vpop.f32.mrf.mxu0
    %152 = vmatprep.mubr.f32.mxu0 0.0
    %153 = vmatmul.mubr.f32.gmra.mxu0 %v81
    %v154 = vpop.f32.mrf.mxu0
    %v155 = vadd.f32 0.0, %v154
    %v156 = vpop.f32.mrf.mxu0
    %157 = vdwg.mxu0
    %v159 = vsel %vm76, %v55, 0
    %v162 = vsel %vm76, %v56, 0
    %164 = vmatprep.subr.mxu0 0.0
    %165 = vmatpush1.msra.mxu0 0.0
    %166 = vmatprep.subr.mxu0 0.0
    %167 = vmatpush1.msra.mxu0 0.0
    %168 = vmatprep.subr.mxu0 0.0
    %169 = vmatpush1.msra.mxu0 0.0
    %170 = vmatprep.subr.mxu0 0.0
    %171 = vmatpush1.msra.mxu0 0.0
    %172 = vmatprep.subr.mxu0 0.0
    %173 = vmatpush1.msra.mxu0 0.0
    %174 = vmatprep.subr.mxu0 0.0
    %175 = vmatpush1.msra.mxu0 0.0
    %176 = vmatprep.subr.mxu0 0.0
    %177 = vmatpush1.msra.mxu0 0.0
    %178 = vmatprep.subr.mxu0 0.0
    %179 = vmatpush1.msra.mxu0 0.0
    %180 = vmatprep.subr.mxu0 0.0
    %181 = vmatpush1.msra.mxu0 0.0
    %182 = vmatprep.subr.mxu0 0.0
    %183 = vmatpush1.msra.mxu0 0.0
    %184 = vmatprep.subr.mxu0 0.0
    %185 = vmatpush1.msra.mxu0 0.0
    %186 = vmatprep.subr.mxu0 0.0
    %187 = vmatpush1.msra.mxu0 0.0
    %188 = vmatprep.subr.mxu0 0.0
    %189 = vmatpush1.msra.mxu0 0.0
    %190 = vmatprep.subr.mxu0 0.0
    %191 = vmatpush1.msra.mxu0 0.0
    %192 = vmatprep.subr.mxu0 0.0
    %193 = vmatpush1.msra.mxu0 %v68
    %194 = vmatprep.subr.mxu0 0.0
    %195 = vmatpush1.msra.mxu0 %v67
    %196 = vmatprep.subr.mxu0 0.0
    %197 = vmatpush2.msra.mxu0 0.0
    %198 = vmatprep.subr.mxu0 0.0
    %199 = vmatpush2.msra.mxu0 0.0
    %200 = vmatprep.subr.mxu0 0.0
    %201 = vmatpush2.msra.mxu0 0.0
    %202 = vmatprep.subr.mxu0 0.0
    %203 = vmatpush2.msra.mxu0 0.0
    %204 = vmatprep.subr.mxu0 0.0
    %205 = vmatpush2.msra.mxu0 0.0
    %206 = vmatprep.subr.mxu0 0.0
    %207 = vmatpush2.msra.mxu0 0.0
    %208 = vmatprep.subr.mxu0 0.0
    %209 = vmatpush2.msra.mxu0 0.0
    %210 = vmatprep.subr.mxu0 0.0
    %211 = vmatpush2.msra.mxu0 0.0
    %212 = vmatprep.subr.mxu0 0.0
    %213 = vmatpush2.msra.mxu0 0.0
    %214 = vmatprep.subr.mxu0 0.0
    %215 = vmatpush2.msra.mxu0 0.0
    %216 = vmatprep.subr.mxu0 0.0
    %217 = vmatpush2.msra.mxu0 0.0
    %218 = vmatprep.subr.mxu0 0.0
    %219 = vmatpush2.msra.mxu0 0.0
    %220 = vmatprep.subr.mxu0 0.0
    %221 = vmatpush2.msra.mxu0 0.0
    %222 = vmatprep.subr.mxu0 0.0
    %223 = vmatpush2.msra.mxu0 0.0
    %224 = vmatprep.subr.mxu0 0.0
    %225 = vmatpush2.msra.mxu0 0.0
    %226 = vmatprep.subr.mxu0 0.0
    %227 = vmatpush2.msra.mxu0 0.0
    %228 = vmatprep.mubr.f32.mxu0 0.0
    %229 = vmatmul.mubr.f32.gmra.mxu0 %v159
    %v230 = vpop.f32.mrf.mxu0
    %v231 = vadd.f32 0.0, %v230
    %v232 = vpop.f32.mrf.mxu0
    %233 = vmatprep.mubr.f32.mxu0 0.0
    %234 = vmatmul.mubr.f32.gmra.mxu0 %v162
    %v235 = vpop.f32.mrf.mxu0
    %v236 = vadd.f32 0.0, %v235
    %v237 = vpop.f32.mrf.mxu0
    %238 = vdwg.mxu0
    %v240 = vsel %vm76, %v150, 0
    %v243 = vsel %vm76, %v155, 0
    %245 = vmatprep.subr.mxu0 0.0
    %246 = vmatpush1.msra.mxu0 0.0
    %247 = vmatprep.subr.mxu0 0.0
    %248 = vmatpush1.msra.mxu0 0.0
    %249 = vmatprep.subr.mxu0 0.0
    %250 = vmatpush1.msra.mxu0 0.0
    %251 = vmatprep.subr.mxu0 0.0
    %252 = vmatpush1.msra.mxu0 0.0
    %253 = vmatprep.subr.mxu0 0.0
    %254 = vmatpush1.msra.mxu0 0.0
    %255 = vmatprep.subr.mxu0 0.0
    %256 = vmatpush1.msra.mxu0 0.0
    %257 = vmatprep.subr.mxu0 0.0
    %258 = vmatpush1.msra.mxu0 0.0
    %259 = vmatprep.subr.mxu0 0.0
    %260 = vmatpush1.msra.mxu0 0.0
    %261 = vmatprep.subr.mxu0 0.0
    %262 = vmatpush1.msra.mxu0 0.0
    %263 = vmatprep.subr.mxu0 0.0
    %264 = vmatpush1.msra.mxu0 0.0
    %265 = vmatprep.subr.mxu0 0.0
    %266 = vmatpush1.msra.mxu0 0.0
    %267 = vmatprep.subr.mxu0 0.0
    %268 = vmatpush1.msra.mxu0 0.0
    %269 = vmatprep.subr.mxu0 0.0
    %270 = vmatpush1.msra.mxu0 0.0
    %271 = vmatprep.subr.mxu0 0.0
    %272 = vmatpush1.msra.mxu0 0.0
    %273 = vmatprep.subr.mxu0 0.0
    %274 = vmatpush1.msra.mxu0 %v66
    %275 = vmatprep.subr.mxu0 0.0
    %276 = vmatpush1.msra.mxu0 %v65
    %277 = vmatprep.subr.mxu0 0.0
    %278 = vmatpush2.msra.mxu0 0.0
    %279 = vmatprep.subr.mxu0 0.0
    %280 = vmatpush2.msra.mxu0 0.0
    %281 = vmatprep.subr.mxu0 0.0
    %282 = vmatpush2.msra.mxu0 0.0
    %283 = vmatprep.subr.mxu0 0.0
    %284 = vmatpush2.msra.mxu0 0.0
    %285 = vmatprep.subr.mxu0 0.0
    %286 = vmatpush2.msra.mxu0 0.0
    %287 = vmatprep.subr.mxu0 0.0
    %288 = vmatpush2.msra.mxu0 0.0
    %289 = vmatprep.subr.mxu0 0.0
    %290 = vmatpush2.msra.mxu0 0.0
    %291 = vmatprep.subr.mxu0 0.0
    %292 = vmatpush2.msra.mxu0 0.0
    %293 = vmatprep.subr.mxu0 0.0
    %294 = vmatpush2.msra.mxu0 0.0
    %295 = vmatprep.subr.mxu0 0.0
    %296 = vmatpush2.msra.mxu0 0.0
    %297 = vmatprep.subr.mxu0 0.0
    %298 = vmatpush2.msra.mxu0 0.0
    %299 = vmatprep.subr.mxu0 0.0
    %300 = vmatpush2.msra.mxu0 0.0
    %301 = vmatprep.subr.mxu0 0.0
    %302 = vmatpush2.msra.mxu0 0.0
    %303 = vmatprep.subr.mxu0 0.0
    %304 = vmatpush2.msra.mxu0 0.0
    %305 = vmatprep.subr.mxu0 0.0
    %306 = vmatpush2.msra.mxu0 0.0
    %307 = vmatprep.subr.mxu0 0.0
    %308 = vmatpush2.msra.mxu0 0.0
    %309 = vmatprep.mubr.f32.mxu0 0.0
    %310 = vmatmul.mubr.f32.gmra.mxu0 %v240
    %v311 = vpop.f32.mrf.mxu0
    %v312 = vadd.f32 %v231, %v311
    %v313 = vpop.f32.mrf.mxu0
    %314 = vmatprep.mubr.f32.mxu0 0.0
    %315 = vmatmul.mubr.f32.gmra.mxu0 %v243
    %v316 = vpop.f32.mrf.mxu0
    %v317 = vadd.f32 %v236, %v316
    %v318 = vpop.f32.mrf.mxu0
    %319 = vdwg.mxu0
    %v320 = vlaneseq
    %v321 = vshrl.u32 %v320, 7
    %v322 = vsub.s32 0, %v321
    %v323 = vrot.slane %v73, %v322
    %v324 = vadd.f32 %v312, %v323
    %v325 = vadd.f32 %v317, %v323
    %v326 = vmax.f32 %v324, 0.0
    %v327 = vmax.f32 %v325, 0.0
    %v328 = vlaneseq
    %v329 = vshrl.u32 %v328, 7
    %v330 = vsub.s32 0, %v329
    %v331 = vrot.slane %v74, %v330
    %v333 = vsel %vm76, %v326, 0
    %v336 = vsel %vm76, %v327, 0
    %338 = vmatprep.subr.mxu0 0.0
    %339 = vmatpush1.msra.mxu0 0.0
    %340 = vmatprep.subr.mxu0 0.0
    %341 = vmatpush1.msra.mxu0 0.0
    %342 = vmatprep.subr.mxu0 0.0
    %343 = vmatpush1.msra.mxu0 0.0
    %344 = vmatprep.subr.mxu0 0.0
    %345 = vmatpush1.msra.mxu0 0.0
    %346 = vmatprep.subr.mxu0 0.0
    %347 = vmatpush1.msra.mxu0 0.0
    %348 = vmatprep.subr.mxu0 0.0
    %349 = vmatpush1.msra.mxu0 0.0
    %350 = vmatprep.subr.mxu0 0.0
    %351 = vmatpush1.msra.mxu0 0.0
    %352 = vmatprep.subr.mxu0 0.0
    %353 = vmatpush1.msra.mxu0 0.0
    %354 = vmatprep.subr.mxu0 0.0
    %355 = vmatpush1.msra.mxu0 0.0
    %356 = vmatprep.subr.mxu0 0.0
    %357 = vmatpush1.msra.mxu0 0.0
    %358 = vmatprep.subr.mxu0 0.0
    %359 = vmatpush1.msra.mxu0 0.0
    %360 = vmatprep.subr.mxu0 0.0
    %361 = vmatpush1.msra.mxu0 0.0
    %362 = vmatprep.subr.mxu0 0.0
    %363 = vmatpush1.msra.mxu0 0.0
    %364 = vmatprep.subr.mxu0 0.0
    %365 = vmatpush1.msra.mxu0 0.0
    %366 = vmatprep.subr.mxu0 0.0
    %367 = vmatpush1.msra.mxu0 %v70
    %368 = vmatprep.subr.mxu0 0.0
    %369 = vmatpush1.msra.mxu0 %v69
    %370 = vmatprep.subr.mxu0 0.0
    %371 = vmatpush2.msra.mxu0 0.0
    %372 = vmatprep.subr.mxu0 0.0
    %373 = vmatpush2.msra.mxu0 0.0
    %374 = vmatprep.subr.mxu0 0.0
    %375 = vmatpush2.msra.mxu0 0.0
    %376 = vmatprep.subr.mxu0 0.0
    %377 = vmatpush2.msra.mxu0 0.0
    %378 = vmatprep.subr.mxu0 0.0
    %379 = vmatpush2.msra.mxu0 0.0
    %380 = vmatprep.subr.mxu0 0.0
    %381 = vmatpush2.msra.mxu0 0.0
    %382 = vmatprep.subr.mxu0 0.0
    %383 = vmatpush2.msra.mxu0 0.0
    %384 = vmatprep.subr.mxu0 0.0
    %385 = vmatpush2.msra.mxu0 0.0
    %386 = vmatprep.subr.mxu0 0.0
    %387 = vmatpush2.msra.mxu0 0.0
    %388 = vmatprep.subr.mxu0 0.0
    %389 = vmatpush2.msra.mxu0 0.0
    %390 = vmatprep.subr.mxu0 0.0
    %391 = vmatpush2.msra.mxu0 0.0
    %392 = vmatprep.subr.mxu0 0.0
    %393 = vmatpush2.msra.mxu0 0.0
    %394 = vmatprep.subr.mxu0 0.0
    %395 = vmatpush2.msra.mxu0 0.0
    %396 = vmatprep.subr.mxu0 0.0
    %397 = vmatpush2.msra.mxu0 0.0
    %398 = vmatprep.subr.mxu0 0.0
    %399 = vmatpush2.msra.mxu0 0.0
    %400 = vmatprep.subr.mxu0 0.0
    %401 = vmatpush2.msra.mxu0 0.0
    %402 = vmatprep.mubr.f32.mxu0 0.0
    %403 = vmatmul.mubr.f32.gmra.mxu0 %v333
    %v404 = vpop.f32.mrf.mxu0
    %v405 = vadd.f32 %v331, %v404
    %v406 = vpop.f32.mrf.mxu0
    %407 = vmatprep.mubr.f32.mxu0 0.0
    %408 = vmatmul.mubr.f32.gmra.mxu0 %v336
    %v409 = vpop.f32.mrf.mxu0
    %v410 = vadd.f32 %v331, %v409
    %v411 = vpop.f32.mrf.mxu0
    %412 = vdwg.mxu0
    %413 = vmatprep.subr.mxu0 0.0
    %414 = vmatpush1.msra.mxu0 0.0
    %415 = vmatprep.subr.mxu0 0.0
    %416 = vmatpush1.msra.mxu0 0.0
    %417 = vmatprep.subr.mxu0 0.0
    %418 = vmatpush1.msra.mxu0 0.0
    %419 = vmatprep.subr.mxu0 0.0
    %420 = vmatpush1.msra.mxu0 0.0
    %421 = vmatprep.subr.mxu0 0.0
    %422 = vmatpush1.msra.mxu0 0.0
    %423 = vmatprep.subr.mxu0 0.0
    %424 = vmatpush1.msra.mxu0 0.0
    %425 = vmatprep.subr.mxu0 0.0
    %426 = vmatpush1.msra.mxu0 0.0
    %427 = vmatprep.subr.mxu0 0.0
    %428 = vmatpush1.msra.mxu0 0.0
    %429 = vmatprep.subr.mxu0 0.0
    %430 = vmatpush1.msra.mxu0 0.0
    %431 = vmatprep.subr.mxu0 0.0
    %432 = vmatpush1.msra.mxu0 0.0
    %433 = vmatprep.subr.mxu0 0.0
    %434 = vmatpush1.msra.mxu0 0.0
    %435 = vmatprep.subr.mxu0 0.0
    %436 = vmatpush1.msra.mxu0 0.0
    %437 = vmatprep.subr.mxu0 0.0
    %438 = vmatpush1.msra.mxu0 0.0
    %439 = vmatprep.subr.mxu0 0.0
    %440 = vmatpush1.msra.mxu0 0.0
    %441 = vmatprep.subr.mxu0 0.0
    %442 = vmatpush1.msra.mxu0 %v72
    %443 = vmatprep.subr.mxu0 0.0
    %444 = vmatpush1.msra.mxu0 %v71
    %445 = vmatprep.subr.mxu0 0.0
    %446 = vmatpush2.msra.mxu0 0.0
    %447 = vmatprep.subr.mxu0 0.0
    %448 = vmatpush2.msra.mxu0 0.0
    %449 = vmatprep.subr.mxu0 0.0
    %450 = vmatpush2.msra.mxu0 0.0
    %451 = vmatprep.subr.mxu0 0.0
    %452 = vmatpush2.msra.mxu0 0.0
    %453 = vmatprep.subr.mxu0 0.0
    %454 = vmatpush2.msra.mxu0 0.0
    %455 = vmatprep.subr.mxu0 0.0
    %456 = vmatpush2.msra.mxu0 0.0
    %457 = vmatprep.subr.mxu0 0.0
    %458 = vmatpush2.msra.mxu0 0.0
    %459 = vmatprep.subr.mxu0 0.0
    %460 = vmatpush2.msra.mxu0 0.0
    %461 = vmatprep.subr.mxu0 0.0
    %462 = vmatpush2.msra.mxu0 0.0
    %463 = vmatprep.subr.mxu0 0.0
    %464 = vmatpush2.msra.mxu0 0.0
    %465 = vmatprep.subr.mxu0 0.0
    %466 = vmatpush2.msra.mxu0 0.0
    %467 = vmatprep.subr.mxu0 0.0
    %468 = vmatpush2.msra.mxu0 0.0
    %469 = vmatprep.subr.mxu0 0.0
    %470 = vmatpush2.msra.mxu0 0.0
    %471 = vmatprep.subr.mxu0 0.0
    %472 = vmatpush2.msra.mxu0 0.0
    %473 = vmatprep.subr.mxu0 0.0
    %474 = vmatpush2.msra.mxu0 0.0
    %475 = vmatprep.subr.mxu0 0.0
    %476 = vmatpush2.msra.mxu0 0.0
    %477 = vmatprep.mubr.f32.mxu0 0.0
    %478 = vmatmul.mubr.f32.gmra.mxu0 %v333
    %v479 = vpop.f32.mrf.mxu0
    %v480 = vadd.f32 0.0, %v479
    %v481 = vpop.f32.mrf.mxu0
    %482 = vmatprep.mubr.f32.mxu0 0.0
    %483 = vmatmul.mubr.f32.gmra.mxu0 %v336
    %v484 = vpop.f32.mrf.mxu0
    %v485 = vadd.f32 0.0, %v484
    %v486 = vpop.f32.mrf.mxu0
    %487 = vdwg.mxu0
    %488 = vmatprep.subr.mxu0 0.0
    %489 = vmatpush1.msra.mxu0 0.0
    %490 = vmatprep.subr.mxu0 0.0
    %491 = vmatpush1.msra.mxu0 0.0
    %492 = vmatprep.subr.mxu0 0.0
    %493 = vmatpush1.msra.mxu0 0.0
    %494 = vmatprep.subr.mxu0 0.0
    %495 = vmatpush1.msra.mxu0 0.0
    %496 = vmatprep.subr.mxu0 0.0
    %497 = vmatpush1.msra.mxu0 0.0
    %498 = vmatprep.subr.mxu0 0.0
    %499 = vmatpush1.msra.mxu0 0.0
    %500 = vmatprep.subr.mxu0 0.0
    %501 = vmatpush1.msra.mxu0 0.0
    %502 = vmatprep.subr.mxu0 0.0
    %503 = vmatpush1.msra.mxu0 0.0
    %504 = vmatprep.subr.mxu0 0.0
    %505 = vmatpush1.msra.mxu0 0.0
    %506 = vmatprep.subr.mxu0 0.0
    %507 = vmatpush1.msra.mxu0 0.0
    %508 = vmatprep.subr.mxu0 0.0
    %509 = vmatpush1.msra.mxu0 0.0
    %510 = vmatprep.subr.mxu0 0.0
    %511 = vmatpush1.msra.mxu0 0.0
    %512 = vmatprep.subr.mxu0 0.0
    %513 = vmatpush1.msra.mxu0 0.0
    %514 = vmatprep.subr.mxu0 0.0
    %515 = vmatpush1.msra.mxu0 0.0
    %516 = vmatprep.subr.mxu0 0.0
    %517 = vmatpush1.msra.mxu0 %v410
    %518 = vmatprep.subr.mxu0 0.0
    %519 = vmatpush1.msra.mxu0 %v405
    %520 = vmatprep.subr.mxu0 0.0
    %521 = vmatpush2.msra.mxu0 0.0
    %522 = vmatprep.subr.mxu0 0.0
    %523 = vmatpush2.msra.mxu0 0.0
    %524 = vmatprep.subr.mxu0 0.0
    %525 = vmatpush2.msra.mxu0 0.0
    %526 = vmatprep.subr.mxu0 0.0
    %527 = vmatpush2.msra.mxu0 0.0
    %528 = vmatprep.subr.mxu0 0.0
    %529 = vmatpush2.msra.mxu0 0.0
    %530 = vmatprep.subr.mxu0 0.0
    %531 = vmatpush2.msra.mxu0 0.0
    %532 = vmatprep.subr.mxu0 0.0
    %533 = vmatpush2.msra.mxu0 0.0
    %534 = vmatprep.subr.mxu0 0.0
    %535 = vmatpush2.msra.mxu0 0.0
    %536 = vmatprep.subr.mxu0 0.0
    %537 = vmatpush2.msra.mxu0 0.0
    %538 = vmatprep.subr.mxu0 0.0
    %539 = vmatpush2.msra.mxu0 0.0
    %540 = vmatprep.subr.mxu0 0.0
    %541 = vmatpush2.msra.mxu0 0.0
    %542 = vmatprep.subr.mxu0 0.0
    %543 = vmatpush2.msra.mxu0 0.0
    %544 = vmatprep.subr.mxu0 0.0
    %545 = vmatpush2.msra.mxu0 0.0
    %546 = vmatprep.subr.mxu0 0.0
    %547 = vmatpush2.msra.mxu0 0.0
    %548 = vmatprep.subr.mxu0 0.0
    %549 = vmatpush2.msra.mxu0 0.0
    %550 = vmatprep.subr.mxu0 0.0
    %551 = vmatpush2.msra.mxu0 0.0
    %552 = vmatprep.mubr.f32.mxu0 0.0
    %553 = vmatmul.mubr.f32.gmra.mxu0 %v78
    %v554 = vpop.f32.mrf.mxu0
    %v555 = vadd.f32 %v480, %v554
    %v556 = vpop.f32.mrf.mxu0
    %557 = vmatprep.mubr.f32.mxu0 0.0
    %558 = vmatmul.mubr.f32.gmra.mxu0 %v81
    %v559 = vpop.f32.mrf.mxu0
    %v560 = vadd.f32 %v485, %v559
    %v561 = vpop.f32.mrf.mxu0
    %562 = vdwg.mxu0
    %v563 = vlaneseq
    %v564 = vshrl.u32 %v563, 7
    %v565 = vsub.s32 0, %v564
    %v566 = vrot.slane %v75, %v565
    %v567 = vadd.f32 %v555, %v566
    %v568 = vadd.f32 %v560, %v566
    %v569 = vlaneseq
    %v570 = vshrl.u32 %v569, 7
    %v571 = vsub.s32 0, %v570
    %v572 = vrot.slane %v64, %v571
    %v574 = vsel %vm76, %v567, 0
    %v577 = vsel %vm76, %v568, 0
    %579 = vmatprep.subr.mxu0 0.0
    %580 = vmatpush1.msra.mxu0 0.0
    %581 = vmatprep.subr.mxu0 0.0
    %582 = vmatpush1.msra.mxu0 0.0
    %583 = vmatprep.subr.mxu0 0.0
    %584 = vmatpush1.msra.mxu0 0.0
    %585 = vmatprep.subr.mxu0 0.0
    %586 = vmatpush1.msra.mxu0 0.0
    %587 = vmatprep.subr.mxu0 0.0
    %588 = vmatpush1.msra.mxu0 0.0
    %589 = vmatprep.subr.mxu0 0.0
    %590 = vmatpush1.msra.mxu0 0.0
    %591 = vmatprep.subr.mxu0 0.0
    %592 = vmatpush1.msra.mxu0 0.0
    %593 = vmatprep.subr.mxu0 0.0
    %594 = vmatpush1.msra.mxu0 0.0
    %595 = vmatprep.subr.mxu0 0.0
    %596 = vmatpush1.msra.mxu0 0.0
    %597 = vmatprep.subr.mxu0 0.0
    %598 = vmatpush1.msra.mxu0 0.0
    %599 = vmatprep.subr.mxu0 0.0
    %600 = vmatpush1.msra.mxu0 0.0
    %601 = vmatprep.subr.mxu0 0.0
    %602 = vmatpush1.msra.mxu0 0.0
    %603 = vmatprep.subr.mxu0 0.0
    %604 = vmatpush1.msra.mxu0 0.0
    %605 = vmatprep.subr.mxu0 0.0
    %606 = vmatpush1.msra.mxu0 0.0
    %607 = vmatprep.subr.mxu0 0.0
    %608 = vmatpush1.msra.mxu0 %v60
    %609 = vmatprep.subr.mxu0 0.0
    %610 = vmatpush1.msra.mxu0 %v59
    %611 = vmatprep.subr.mxu0 0.0
    %612 = vmatpush2.msra.mxu0 0.0
    %613 = vmatprep.subr.mxu0 0.0
    %614 = vmatpush2.msra.mxu0 0.0
    %615 = vmatprep.subr.mxu0 0.0
    %616 = vmatpush2.msra.mxu0 0.0
    %617 = vmatprep.subr.mxu0 0.0
    %618 = vmatpush2.msra.mxu0 0.0
    %619 = vmatprep.subr.mxu0 0.0
    %620 = vmatpush2.msra.mxu0 0.0
    %621 = vmatprep.subr.mxu0 0.0
    %622 = vmatpush2.msra.mxu0 0.0
    %623 = vmatprep.subr.mxu0 0.0
    %624 = vmatpush2.msra.mxu0 0.0
    %625 = vmatprep.subr.mxu0 0.0
    %626 = vmatpush2.msra.mxu0 0.0
    %627 = vmatprep.subr.mxu0 0.0
    %628 = vmatpush2.msra.mxu0 0.0
    %629 = vmatprep.subr.mxu0 0.0
    %630 = vmatpush2.msra.mxu0 0.0
    %631 = vmatprep.subr.mxu0 0.0
    %632 = vmatpush2.msra.mxu0 0.0
    %633 = vmatprep.subr.mxu0 0.0
    %634 = vmatpush2.msra.mxu0 0.0
    %635 = vmatprep.subr.mxu0 0.0
    %636 = vmatpush2.msra.mxu0 0.0
    %637 = vmatprep.subr.mxu0 0.0
    %638 = vmatpush2.msra.mxu0 0.0
    %639 = vmatprep.subr.mxu0 0.0
    %640 = vmatpush2.msra.mxu0 0.0
    %641 = vmatprep.subr.mxu0 0.0
    %642 = vmatpush2.msra.mxu0 0.0
    %643 = vmatprep.mubr.f32.mxu0 0.0
    %644 = vmatmul.mubr.f32.gmra.mxu0 %v574
    %v645 = vpop.f32.mrf.mxu0
    %v646 = vadd.f32 %v572, %v645
    %v647 = vpop.f32.mrf.mxu0
    %648 = vmatprep.mubr.f32.mxu0 0.0
    %649 = vmatmul.mubr.f32.gmra.mxu0 %v577
    %v650 = vpop.f32.mrf.mxu0
    %v651 = vadd.f32 %v572, %v650
    %v652 = vpop.f32.mrf.mxu0
    %653 = vdwg.mxu0
    %654 = vmax.xlane.f32.xlu0 %v646
    %v655 = vpop.xlane.xlu0 %654
    %656 = vmax.xlane.f32.xlu0 %v651
    %v657 = vpop.xlane.xlu0 %656
    %v658 = vsub.f32 %v646, %v655
    %v659 = vsub.f32 %v651, %v657
    %v660 = vmul.f32 %v658, 1.442695
    %v661 = vpow.pop %v660
    %v662 = vmul.f32 %v659, 1.442695
    %v663 = vpow.pop %v662
    %664 = vadd.xlane.f32.xlu0 %v661
    %v665 = vpop.xlane.xlu0 %664
    %666 = vadd.xlane.f32.xlu0 %v663
    %v667 = vpop.xlane.xlu0 %666
    %v668 = vrcp.pop %v665
    %v669 = vrcp.pop %v667
    %v670 = vmul.f32 %v661, %v668
    %v671 = vmul.f32 %v663, %v669
    %v672 = vadd.f32 %v567, %v567
    %v673 = vadd.f32 %v568, %v568
    %v674 = vmul.f32 %v672, 0.5
    %v675 = vmul.f32 %v673, 0.5
    %v676 = vmul.f32 %v672, 0.70710677
    %v677 = vmul.f32 %v673, 0.70710677
    %v678 = verf.f32.pop %v676
    %v679 = verf.f32.pop %v677
    %v680 = vadd.f32 %v678, 1.0
    %v681 = vadd.f32 %v679, 1.0
    %v682 = vmul.f32 %v674, %v680
    %v683 = vmul.f32 %v675, %v681
    %v684 = vlaneseq
    %v685 = vshrl.u32 %v684, 7
    %v686 = vsub.s32 0, %v685
    %v687 = vrot.slane %v63, %v686
    %v689 = vsel %vm76, %v682, 0
    %v692 = vsel %vm76, %v683, 0
    %694 = vmatprep.subr.mxu0 0.0
    %695 = vmatpush1.msra.mxu0 0.0
    %696 = vmatprep.subr.mxu0 0.0
    %697 = vmatpush1.msra.mxu0 0.0
    %698 = vmatprep.subr.mxu0 0.0
    %699 = vmatpush1.msra.mxu0 0.0
    %700 = vmatprep.subr.mxu0 0.0
    %701 = vmatpush1.msra.mxu0 0.0
    %702 = vmatprep.subr.mxu0 0.0
    %703 = vmatpush1.msra.mxu0 0.0
    %704 = vmatprep.subr.mxu0 0.0
    %705 = vmatpush1.msra.mxu0 0.0
    %706 = vmatprep.subr.mxu0 0.0
    %707 = vmatpush1.msra.mxu0 0.0
    %708 = vmatprep.subr.mxu0 0.0
    %709 = vmatpush1.msra.mxu0 0.0
    %710 = vmatprep.subr.mxu0 0.0
    %711 = vmatpush1.msra.mxu0 0.0
    %712 = vmatprep.subr.mxu0 0.0
    %713 = vmatpush1.msra.mxu0 0.0
    %714 = vmatprep.subr.mxu0 0.0
    %715 = vmatpush1.msra.mxu0 0.0
    %716 = vmatprep.subr.mxu0 0.0
    %717 = vmatpush1.msra.mxu0 0.0
    %718 = vmatprep.subr.mxu0 0.0
    %719 = vmatpush1.msra.mxu0 0.0
    %720 = vmatprep.subr.mxu0 0.0
    %721 = vmatpush1.msra.mxu0 0.0
    %722 = vmatprep.subr.mxu0 0.0
    %723 = vmatpush1.msra.mxu0 %v62
    %724 = vmatprep.subr.mxu0 0.0
    %725 = vmatpush1.msra.mxu0 %v61
    %726 = vmatprep.subr.mxu0 0.0
    %727 = vmatpush2.msra.mxu0 0.0
    %728 = vmatprep.subr.mxu0 0.0
    %729 = vmatpush2.msra.mxu0 0.0
    %730 = vmatprep.subr.mxu0 0.0
    %731 = vmatpush2.msra.mxu0 0.0
    %732 = vmatprep.subr.mxu0 0.0
    %733 = vmatpush2.msra.mxu0 0.0
    %734 = vmatprep.subr.mxu0 0.0
    %735 = vmatpush2.msra.mxu0 0.0
    %736 = vmatprep.subr.mxu0 0.0
    %737 = vmatpush2.msra.mxu0 0.0
    %738 = vmatprep.subr.mxu0 0.0
    %739 = vmatpush2.msra.mxu0 0.0
    %740 = vmatprep.subr.mxu0 0.0
    %741 = vmatpush2.msra.mxu0 0.0
    %742 = vmatprep.subr.mxu0 0.0
    %743 = vmatpush2.msra.mxu0 0.0
    %744 = vmatprep.subr.mxu0 0.0
    %745 = vmatpush2.msra.mxu0 0.0
    %746 = vmatprep.subr.mxu0 0.0
    %747 = vmatpush2.msra.mxu0 0.0
    %748 = vmatprep.subr.mxu0 0.0
    %749 = vmatpush2.msra.mxu0 0.0
    %750 = vmatprep.subr.mxu0 0.0
    %751 = vmatpush2.msra.mxu0 0.0
    %752 = vmatprep.subr.mxu0 0.0
    %753 = vmatpush2.msra.mxu0 0.0
    %754 = vmatprep.subr.mxu0 0.0
    %755 = vmatpush2.msra.mxu0 0.0
    %756 = vmatprep.subr.mxu0 0.0
    %757 = vmatpush2.msra.mxu0 0.0
    %758 = vmatprep.mubr.f32.mxu0 0.0
    %759 = vmatmul.mubr.f32.gmra.mxu0 %v689
    %v760 = vpop.f32.mrf.mxu0
    %v761 = vadd.f32 %v687, %v760
    %v762 = vpop.f32.mrf.mxu0
    %763 = vmatprep.mubr.f32.mxu0 0.0
    %764 = vmatmul.mubr.f32.gmra.mxu0 %v692
    %v765 = vpop.f32.mrf.mxu0
    %v766 = vadd.f32 %v687, %v765
    %v767 = vpop.f32.mrf.mxu0
    %768 = vdwg.mxu0
    %769 = vst [vmem:[%s3] sm:$0xff] %v761
    %770 = vst [vmem:[%s3 + $0x8] sm:$0xff] %v766
    %771 = vst [vmem:[%s3 + $0x10] sm:$0xff] %v670
    %772 = vst [vmem:[%s3 + $0x18] sm:$0xff] %v671
    // Predicated region
    $region26: #{basic_model_forward.1} parent=1 // pred_check
      _
    $region27: #{basic_model_forward.1} parent=1 // pred_check_branch
      %774 = sbr.rel (0) target = $region29
    $region28: #{basic_model_forward.1} parent=1 // pred_region
      _
    $region29: #{basic_model_forward.1} parent=1 // pred_fallthru
      _
    // Predicated region
    $region30: #{basic_model_forward.1} parent=1 // pred_check
      _
    $region31: #{basic_model_forward.1} parent=1 // pred_check_branch
      %776 = sbr.rel (0) target = $region33
    $region32: #{basic_model_forward.1} parent=1 // pred_region
      _
    $region33: #{basic_model_forward.1} parent=1 // pred_fallthru
      _
    %777 = vsyncpa [#allocation3], 1
    %778 = vsyncpa [#allocation5], 1

</llo_original>
